<compile_context>
chip_gen: v5e
topology: v5e:2x2
jax: 0.10.0
libtpu: 0.0.40
codegen_flags: <defaults>
</compile_context>

<pallas_src>
import math
import functools

import jax
import jax.numpy as jnp
from jax.experimental import pallas as pl
from jax.experimental.pallas import tpu as pltpu


def _round_up(x, m):
    return ((x + m - 1) // m) * m


# ----------------------------------------------------------------------------
# Pallas kernel: full DuelingDQN forward on lane-dense, VMEM-resident tiles.
# ----------------------------------------------------------------------------
def dueling_dqn_kernel(x_ref, w_ref, b_ref, out_ref, *, s_pad, action_dim):
    lane = out_ref.shape[-1]                       # padded width (128)
    o1 = s_pad                                      # W1  rows [0 : s_pad)
    o2 = o1 + lane                                  # W2  rows [o1 : o2)
    o3 = o2 + lane                                  # Wbr rows [o2 : o3)  (wa1|wv1)
    o4 = o3 + lane                                  # Whd rows [o3 : o4)  (wa2 ⊕ wv2)

    x = x_ref[...]

    # feature = ReLU(Linear) -> ReLU(NoisyLinear)
    h = jnp.dot(x, w_ref[0:o1, :], preferred_element_type=jnp.float32) + b_ref[0:1, :]
    h = jnp.maximum(h, 0.0)
    feat = jnp.dot(h, w_ref[o1:o2, :], preferred_element_type=jnp.float32) + b_ref[1:2, :]
    feat = jnp.maximum(feat, 0.0)

    # fused advantage|value hidden layer (disjoint lanes -> ReLU is identical
    # to applying it per-branch)
    hv = jnp.dot(feat, w_ref[o2:o3, :], preferred_element_type=jnp.float32) + b_ref[2:3, :]
    hv = jnp.maximum(hv, 0.0)

    # fused head: adv in lanes [0:action_dim), value in lane action_dim
    head = jnp.dot(hv, w_ref[o3:o4, :], preferred_element_type=jnp.float32) + b_ref[3:4, :]

    lane_idx = jax.lax.broadcasted_iota(jnp.int32, head.shape, 1)
    adv_mask = lane_idx < action_dim
    adv = jnp.where(adv_mask, head, 0.0)
    adv_mean = jnp.sum(adv, axis=-1, keepdims=True) * (1.0 / action_dim)
    val = jnp.sum(jnp.where(lane_idx == action_dim, head, 0.0),
                  axis=-1, keepdims=True)

    # dueling combine: value + advantage - mean(advantage) on the real lanes;
    # padded lanes written as zeros (lane-dense, unmasked vst).
    out_ref[...] = jnp.where(adv_mask, val + head - adv_mean, 0.0).astype(out_ref.dtype)


# ----------------------------------------------------------------------------
# Wrapper: batch-tiled grid, lane-dense padded output, packed weight slabs.
# ----------------------------------------------------------------------------
@functools.partial(jax.jit, static_argnames=("action_dim",))
def dueling_dqn_forward(x, wslab, bslab, *, action_dim):
    batch, state_dim = x.shape
    slab_rows, lane = wslab.shape
    s_pad = slab_rows - 3 * lane

    # batch tiling: tile is a multiple of 8, capped at 256 rows
    b_pad = _round_up(max(batch, 8), 8)
    if b_pad >= 256:
        tb = 256
        b_pad = _round_up(batch, tb)
    else:
        tb = b_pad

    x_p = jnp.zeros((b_pad, s_pad), jnp.float32).at[:batch, :state_dim].set(x)

    kernel = functools.partial(dueling_dqn_kernel, s_pad=s_pad, action_dim=action_dim)

    out_padded = pl.pallas_call(
        kernel,
        out_shape=jax.ShapeDtypeStruct((b_pad, lane), jnp.float32),
        grid_spec=pltpu.PrefetchScalarGridSpec(
            num_scalar_prefetch=0,
            grid=(b_pad // tb,),
            in_specs=[
                pl.BlockSpec((tb, s_pad), lambda i: (i, 0)),        # x tile
                pl.BlockSpec((slab_rows, lane), lambda i: (0, 0)),  # packed weights
                pl.BlockSpec((8, lane), lambda i: (0, 0)),          # packed biases
            ],
            out_specs=pl.BlockSpec((tb, lane), lambda i: (i, 0)),   # lane-dense out
        ),
        compiler_params=pltpu.CompilerParams(
            dimension_semantics=("parallel",)),                     # megacore on v7x
    )(x_p, wslab, bslab)

    return out_padded[:batch, :action_dim]


# ----------------------------------------------------------------------------
# Parameter packing (plain JAX glue, done once).
# ----------------------------------------------------------------------------
def pack_params(raw, state_dim, action_dim, hidden_dim):
    """Pack raw (out,in)-layout effective weights into two lane-aligned slabs."""
    h0, h1, h2 = hidden_dim
    lane = max(128,
               _round_up(h0, 128), _round_up(h1, 128),
               _round_up(2 * h2, 128), _round_up(action_dim + 1, 128))
    s_pad = _round_up(state_dim, 128)

    w1 = jnp.zeros((s_pad, lane), jnp.float32).at[:state_dim, :h0].set(raw["w1"].T)
    w2 = jnp.zeros((lane, lane), jnp.float32).at[:h0, :h1].set(raw["w2"].T)
    wbr = (jnp.zeros((lane, lane), jnp.float32)
           .at[:h1, :h2].set(raw["wa1"].T)
           .at[:h1, h2:2 * h2].set(raw["wv1"].T))
    whead = (jnp.zeros((lane, lane), jnp.float32)
             .at[:h2, :action_dim].set(raw["wa2"].T)
             .at[h2:2 * h2, action_dim:action_dim + 1].set(raw["wv2"].T))
    wslab = jnp.concatenate([w1, w2, wbr, whead], axis=0)

    bslab = (jnp.zeros((8, lane), jnp.float32)
             .at[0, :h0].set(raw["b1"])
             .at[1, :h1].set(raw["b2"])
             .at[2, :h2].set(raw["ba1"])
             .at[2, h2:2 * h2].set(raw["bv1"])
             .at[3, :action_dim].set(raw["ba2"])
             .at[3, action_dim].set(raw["bv2"][0]))
    return wslab, bslab


# ----------------------------------------------------------------------------
# Deterministic parameter construction (emulates the PyTorch __init__).
# ----------------------------------------------------------------------------
def _scale_noise(key, size):
    x = jax.random.normal(key, (size,), dtype=jnp.float32)
    return jnp.sign(x) * jnp.sqrt(jnp.abs(x))


def make_noisy_linear(key, in_features, out_features, std_init=0.5):
    """Effective (training-mode) weight (out,in) and bias (out,)."""
    k_wmu, k_bmu, k_ein, k_eout, k_beps = jax.random.split(key, 5)
    mu_range = 1.0 / math.sqrt(in_features)
    weight_mu = jax.random.uniform(
        k_wmu, (out_features, in_features), minval=-mu_range, maxval=mu_range,
        dtype=jnp.float32)
    weight_sigma = jnp.full((out_features, in_features),
                            std_init / math.sqrt(in_features), dtype=jnp.float32)
    bias_mu = jax.random.uniform(
        k_bmu, (out_features,), minval=-mu_range, maxval=mu_range, dtype=jnp.float32)
    bias_sigma = jnp.full((out_features,),
                          std_init / math.sqrt(out_features), dtype=jnp.float32)
    eps_in = _scale_noise(k_ein, in_features)
    eps_out = _scale_noise(k_eout, out_features)
    w_eff = weight_mu + weight_sigma * jnp.outer(eps_out, eps_in)
    b_eff = bias_mu + bias_sigma * _scale_noise(k_beps, out_features)
    return w_eff, b_eff


def make_linear(key, in_features, out_features):
    k_w, k_b = jax.random.split(key)
    bound = 1.0 / math.sqrt(in_features)
    w = jax.random.uniform(k_w, (out_features, in_features),
                           minval=-bound, maxval=bound, dtype=jnp.float32)
    b = jax.random.uniform(k_b, (out_features,),
                           minval=-bound, maxval=bound, dtype=jnp.float32)
    return w, b


def build_raw_params(key, state_dim, action_dim, hidden_dim):
    keys = jax.random.split(key, 6)
    w1, b1 = make_linear(keys[0], state_dim, hidden_dim[0])
    w2, b2 = make_noisy_linear(keys[1], hidden_dim[0], hidden_dim[1])
    wa1, ba1 = make_noisy_linear(keys[2], hidden_dim[1], hidden_dim[2])
    wa2, ba2 = make_noisy_linear(keys[3], hidden_dim[2], action_dim)
    wv1, bv1 = make_noisy_linear(keys[4], hidden_dim[1], hidden_dim[2])
    wv2, bv2 = make_noisy_linear(keys[5], hidden_dim[2], 1)
    return {"w1": w1, "b1": b1, "w2": w2, "b2": b2,
            "wa1": wa1, "ba1": ba1, "wa2": wa2, "ba2": ba2,
            "wv1": wv1, "bv1": bv1, "wv2": wv2, "bv2": bv2}


# ----------------------------------------------------------------------------
# Pure-JAX reference (sanity check of kernel semantics).
# ----------------------------------------------------------------------------
def reference_forward(x, p):
    h = jnp.maximum(x @ p["w1"].T + p["b1"], 0.0)
    feat = jnp.maximum(h @ p["w2"].T + p["b2"], 0.0)
    ah = jnp.maximum(feat @ p["wa1"].T + p["ba1"], 0.0)
    adv = ah @ p["wa2"].T + p["ba2"]
    vh = jnp.maximum(feat @ p["wv1"].T + p["bv1"], 0.0)
    val = vh @ p["wv2"].T + p["bv2"]
    return val + adv - adv.mean(axis=-1, keepdims=True)


if __name__ == "__main__":
    # Small shapes consistent with DuelingDQN(state_dim, action_dim, hidden_dim)
    batch = 4
    state_dim = 16
    action_dim = 6
    hidden_dim = [32, 32, 32]

    key = jax.random.PRNGKey(0)
    k_x, k_p = jax.random.split(key)
    x = jax.random.normal(k_x, (batch, state_dim), dtype=jnp.float32)

    raw = build_raw_params(k_p, state_dim, action_dim, hidden_dim)
    wslab, bslab = pack_params(raw, state_dim, action_dim, hidden_dim)

    out = dueling_dqn_forward(x, wslab, bslab, action_dim=action_dim)
    out = jax.block_until_ready(out)

    ref = reference_forward(x, raw)
    assert out.shape == (batch, action_dim)
    assert jnp.allclose(out, ref, atol=1e-4, rtol=1e-4), "mismatch vs reference"

    print("KERNEL_OK")
</pallas_src>

<mosaic_0001>
module attributes {stable_mosaic.version = 11 : i64} {
  func.func @dueling_dqn_kernel(%arg0: i32, %arg1: memref<8x128xf32, #tpu.memory_space<vmem>>, %arg2: memref<512x128xf32, #tpu.memory_space<vmem>>, %arg3: memref<8x128xf32, #tpu.memory_space<vmem>>, %arg4: memref<8x128xf32, #tpu.memory_space<vmem>>) attributes {dimension_semantics = [#tpu.dimension_semantics<parallel>], iteration_bounds = array<i64: 1>, scalar_prefetch = 0 : i64, scratch_operands = 0 : i64, tpu.core_type = #tpu.core_type<tc>, window_params = [{transform_indices = @transform_0, window_bounds = array<i64: 8, 128>}, {pipeline_mode = #tpu.pipeline_mode<synchronous>, transform_indices = @transform_1, window_bounds = array<i64: 512, 128>}, {pipeline_mode = #tpu.pipeline_mode<synchronous>, transform_indices = @transform_2, window_bounds = array<i64: 8, 128>}, {transform_indices = @transform_3, window_bounds = array<i64: 8, 128>}]} {
    %c0 = arith.constant 0 : index
    %c0_0 = arith.constant 0 : index
    %0 = vector.load %arg1[%c0, %c0_0] : memref<8x128xf32, #tpu.memory_space<vmem>>, vector<8x128xf32>
    %c0_1 = arith.constant 0 : index
    %c0_2 = arith.constant 0 : index
    %1 = vector.load %arg2[%c0_1, %c0_2] : memref<512x128xf32, #tpu.memory_space<vmem>>, vector<128x128xf32>
    %cst = arith.constant dense<0.000000e+00> : vector<8x128xf32>
    %2 = tpu.matmul %0, %1, %cst {dimension_numbers = #tpu.dot_dimension_numbers<[1], [0], [0], [1], [0, 0, 1, 1], [], []>} : vector<8x128xf32>, vector<128x128xf32>, vector<8x128xf32> -> vector<8x128xf32>
    %c0_3 = arith.constant 0 : index
    %c0_4 = arith.constant 0 : index
    %3 = vector.load %arg3[%c0_3, %c0_4] : memref<8x128xf32, #tpu.memory_space<vmem>>, vector<1x128xf32>
    %4 = vector.broadcast %3 : vector<1x128xf32> to vector<8x128xf32>
    %5 = arith.addf %2, %4 : vector<8x128xf32>
    %cst_5 = arith.constant 0.000000e+00 : f32
    %6 = vector.broadcast %cst_5 : f32 to vector<8x128xf32>
    %7 = arith.maximumf %5, %6 : vector<8x128xf32>
    %c128 = arith.constant 128 : index
    %c0_6 = arith.constant 0 : index
    %8 = vector.load %arg2[%c128, %c0_6] : memref<512x128xf32, #tpu.memory_space<vmem>>, vector<128x128xf32>
    %cst_7 = arith.constant dense<0.000000e+00> : vector<8x128xf32>
    %9 = tpu.matmul %7, %8, %cst_7 {dimension_numbers = #tpu.dot_dimension_numbers<[1], [0], [0], [1], [0, 0, 1, 1], [], []>} : vector<8x128xf32>, vector<128x128xf32>, vector<8x128xf32> -> vector<8x128xf32>
    %c1 = arith.constant 1 : index
    %c0_8 = arith.constant 0 : index
    %10 = vector.load %arg3[%c1, %c0_8] : memref<8x128xf32, #tpu.memory_space<vmem>>, vector<1x128xf32>
    %11 = vector.broadcast %10 : vector<1x128xf32> to vector<8x128xf32>
    %12 = arith.addf %9, %11 : vector<8x128xf32>
    %cst_9 = arith.constant 0.000000e+00 : f32
    %13 = vector.broadcast %cst_9 : f32 to vector<8x128xf32>
    %14 = arith.maximumf %12, %13 : vector<8x128xf32>
    %c256 = arith.constant 256 : index
    %c0_10 = arith.constant 0 : index
    %15 = vector.load %arg2[%c256, %c0_10] : memref<512x128xf32, #tpu.memory_space<vmem>>, vector<128x128xf32>
    %cst_11 = arith.constant dense<0.000000e+00> : vector<8x128xf32>
    %16 = tpu.matmul %14, %15, %cst_11 {dimension_numbers = #tpu.dot_dimension_numbers<[1], [0], [0], [1], [0, 0, 1, 1], [], []>} : vector<8x128xf32>, vector<128x128xf32>, vector<8x128xf32> -> vector<8x128xf32>
    %c2 = arith.constant 2 : index
    %c0_12 = arith.constant 0 : index
    %17 = vector.load %arg3[%c2, %c0_12] : memref<8x128xf32, #tpu.memory_space<vmem>>, vector<1x128xf32>
    %18 = vector.broadcast %17 : vector<1x128xf32> to vector<8x128xf32>
    %19 = arith.addf %16, %18 : vector<8x128xf32>
    %cst_13 = arith.constant 0.000000e+00 : f32
    %20 = vector.broadcast %cst_13 : f32 to vector<8x128xf32>
    %21 = arith.maximumf %19, %20 : vector<8x128xf32>
    %c384 = arith.constant 384 : index
    %c0_14 = arith.constant 0 : index
    %22 = vector.load %arg2[%c384, %c0_14] : memref<512x128xf32, #tpu.memory_space<vmem>>, vector<128x128xf32>
    %cst_15 = arith.constant dense<0.000000e+00> : vector<8x128xf32>
    %23 = tpu.matmul %21, %22, %cst_15 {dimension_numbers = #tpu.dot_dimension_numbers<[1], [0], [0], [1], [0, 0, 1, 1], [], []>} : vector<8x128xf32>, vector<128x128xf32>, vector<8x128xf32> -> vector<8x128xf32>
    %c3 = arith.constant 3 : index
    %c0_16 = arith.constant 0 : index
    %24 = vector.load %arg3[%c3, %c0_16] : memref<8x128xf32, #tpu.memory_space<vmem>>, vector<1x128xf32>
    %25 = vector.broadcast %24 : vector<1x128xf32> to vector<8x128xf32>
    %26 = arith.addf %23, %25 : vector<8x128xf32>
    %27 = tpu.iota {dimensions = array<i32: 1>} : vector<8x128xi32>
    %c6_i32 = arith.constant 6 : i32
    %28 = vector.broadcast %c6_i32 : i32 to vector<8x128xi32>
    %29 = arith.cmpi slt, %27, %28 : vector<8x128xi32>
    %cst_17 = arith.constant 0.000000e+00 : f32
    %30 = vector.broadcast %cst_17 : f32 to vector<8x128xf32>
    %31 = arith.select %29, %26, %30 : vector<8x128xi1>, vector<8x128xf32>
    %cst_18 = arith.constant dense<0.000000e+00> : vector<8xf32>
    %32 = vector.multi_reduction <add>, %31, %cst_18 [1] : vector<8x128xf32> to vector<8xf32>
    %33 = vector.shape_cast %32 : vector<8xf32> to vector<8x1xf32>
    %cst_19 = arith.constant 0.166666672 : f32
    %34 = vector.broadcast %cst_19 : f32 to vector<8x1xf32>
    %35 = arith.mulf %33, %34 : vector<8x1xf32>
    %c6_i32_20 = arith.constant 6 : i32
    %36 = vector.broadcast %c6_i32_20 : i32 to vector<8x128xi32>
    %37 = arith.cmpi eq, %27, %36 : vector<8x128xi32>
    %cst_21 = arith.constant 0.000000e+00 : f32
    %38 = vector.broadcast %cst_21 : f32 to vector<8x128xf32>
    %39 = arith.select %37, %26, %38 : vector<8x128xi1>, vector<8x128xf32>
    %cst_22 = arith.constant dense<0.000000e+00> : vector<8xf32>
    %40 = vector.multi_reduction <add>, %39, %cst_22 [1] : vector<8x128xf32> to vector<8xf32>
    %41 = vector.shape_cast %40 : vector<8xf32> to vector<8x1xf32>
    %42 = vector.broadcast %41 : vector<8x1xf32> to vector<8x128xf32>
    %43 = arith.addf %42, %26 : vector<8x128xf32>
    %44 = vector.broadcast %35 : vector<8x1xf32> to vector<8x128xf32>
    %45 = arith.subf %43, %44 : vector<8x128xf32>
    %cst_23 = arith.constant 0.000000e+00 : f32
    %46 = vector.broadcast %cst_23 : f32 to vector<8x128xf32>
    %47 = arith.select %29, %45, %46 : vector<8x128xi1>, vector<8x128xf32>
    %c0_24 = arith.constant 0 : index
    %c0_25 = arith.constant 0 : index
    %48 = vector.load %arg4[%c0_24, %c0_25] : memref<8x128xf32, #tpu.memory_space<vmem>>, vector<8x128xf32>
    tpu.vector_store %arg4[%c0_24, %c0_25], %47 {strides = array<i32>} : memref<8x128xf32, #tpu.memory_space<vmem>>, vector<8x128xf32>,
    return
  }
  func.func @transform_0(%arg0: i32) -> (i32, i32) {
    %c0_i32 = arith.constant 0 : i32
    %c0_i32_0 = arith.constant 0 : i32
    return %arg0, %c0_i32 : i32, i32
  }
  func.func @transform_1(%arg0: i32) -> (i32, i32) {
    %c0_i32 = arith.constant 0 : i32
    %c0_i32_0 = arith.constant 0 : i32
    %c0_i32_1 = arith.constant 0 : i32
    return %c0_i32, %c0_i32_0 : i32, i32
  }
  func.func @transform_2(%arg0: i32) -> (i32, i32) {
    %c0_i32 = arith.constant 0 : i32
    %c0_i32_0 = arith.constant 0 : i32
    %c0_i32_1 = arith.constant 0 : i32
    return %c0_i32, %c0_i32_0 : i32, i32
  }
  func.func @transform_3(%arg0: i32) -> (i32, i32) {
    %c0_i32 = arith.constant 0 : i32
    %c0_i32_0 = arith.constant 0 : i32
    return %arg0, %c0_i32 : i32, i32
  }
}

</mosaic_0001>

<llo_original>
// kernel: dueling_dqn_forward.1
$region0: #{dueling_dqn_forward.1}
  #allocation0 [shape = 'u32[]', space=smem, size = 0x4, offset = 0x4, fixed_abs, tag = 'smem constant byte address 0x4 - core index']
  #allocation1 [shape = 'u32[72,128]{1,0:T(1,128)}', space=vmem, size = 0x9000, scoped, tag = 'internal scratch']
  %s0 = inlined_call_operand.vmem [shape: f32[8,128], index: 0, kind: input, shape index: {}]
  %s1 = inlined_call_operand.hbm [shape: f32[512,128], index: 1, kind: input, shape index: {}]
  %s2 = inlined_call_operand.vmem [shape: f32[8,128], index: 2, kind: input, shape index: {}]
  %s3 = inlined_call_operand.vmem [shape: f32[8,128], index: 3, kind: output, shape index: {}]
  %s4 = sld [smem:[#allocation0]]
  $region26: #{dueling_dqn_forward.1} parent=0
    _
  %s6 = ssub.s32 1, %s4
  %s7 = scalar_select 0, %s6, %s4
  $region1: #{dueling_dqn_forward.1} parent=0
    #allocation2 [shape = 'u8[262144]{0}', space=vmem, size = 0x40000, scoped, tag = 'input window, operand 1, single buffered']
    #allocation3 [shape = 's32[1]{0}', space=sflag, size = 0x4, scoped, tag = 'scoped memory for dueling_dqn_forward.1']
    %8 = vsyncpa [#allocation3], 0
    // Predicated region
    $region2: #{dueling_dqn_forward.1} parent=1 // pred_check
      _
    $region3: #{dueling_dqn_forward.1} parent=1 // pred_check_branch
      %10 = sbr.rel (0) target = $region5
    $region4: #{dueling_dqn_forward.1} parent=1 // pred_region
      _
    $region5: #{dueling_dqn_forward.1} parent=1 // pred_fallthru
      _
    // Predicated region
    $region6: #{dueling_dqn_forward.1} parent=1 // pred_check
      _
    $region7: #{dueling_dqn_forward.1} parent=1 // pred_check_branch
      %12 = sbr.rel (0) target = $region9
    $region8: #{dueling_dqn_forward.1} parent=1 // pred_region
      %14 = vsyncadd [#allocation3], 0
      %s15 = sshll.u32 %s1, 4
      %s16 = int_to_ptr.hbm [resolvable:$true] %s15
      %s17 = sshll.u32 [#allocation2], 4
      %s18 = int_to_ptr.vmem [resolvable:$true] %s17
      %23 = dma.hbm_to_vmem [thread:$0]  %s16, 8192, %s18, [#allocation3], 128, 128, 8
    $region9: #{dueling_dqn_forward.1} parent=1 // pred_fallthru
      _
    // Predicated region
    $region10: #{dueling_dqn_forward.1} parent=1 // pred_check
      _
    $region11: #{dueling_dqn_forward.1} parent=1 // pred_check_branch
      %25 = sbr.rel (0) target = $region13
    $region12: #{dueling_dqn_forward.1} parent=1 // pred_region
      _
    $region13: #{dueling_dqn_forward.1} parent=1 // pred_fallthru
      _
    // Predicated region
    $region14: #{dueling_dqn_forward.1} parent=1 // pred_check
      _
    $region15: #{dueling_dqn_forward.1} parent=1 // pred_check_branch
      %27 = sbr.rel (0) target = $region17
    $region16: #{dueling_dqn_forward.1} parent=1 // pred_region
      %29 = dma.done [#allocation3], 8192
    $region17: #{dueling_dqn_forward.1} parent=1 // pred_fallthru
      _
    %v30 = vld [vmem:[%s0] sm:$0xff]
    %v31 = vld [vmem:[#allocation2] sm:$0xff]
    %v32 = vld [vmem:[#allocation2 + $0x8] sm:$0xff]
    %v33 = vld [vmem:[#allocation2 + $0x10] sm:$0xff]
    %v34 = vld [vmem:[#allocation2 + $0x18] sm:$0xff]
    %v35 = vld [vmem:[#allocation2 + $0x20] sm:$0xff]
    %v36 = vld [vmem:[#allocation2 + $0x28] sm:$0xff]
    %v37 = vld [vmem:[#allocation2 + $0x30] sm:$0xff]
    %v38 = vld [vmem:[#allocation2 + $0x38] sm:$0xff]
    %v39 = vld [vmem:[#allocation2 + $0x40] sm:$0xff]
    %v40 = vld [vmem:[#allocation2 + $0x48] sm:$0xff]
    %v41 = vld [vmem:[#allocation2 + $0x50] sm:$0xff]
    %v42 = vld [vmem:[#allocation2 + $0x58] sm:$0xff]
    %v43 = vld [vmem:[#allocation2 + $0x60] sm:$0xff]
    %v44 = vld [vmem:[#allocation2 + $0x68] sm:$0xff]
    %v45 = vld [vmem:[#allocation2 + $0x70] sm:$0xff]
    %v46 = vld [vmem:[#allocation2 + $0x78] sm:$0xff]
    %v47 = vld [vmem:[%s2] sm:$0x1]
    %v48 = vperm.slane %v47, 0
    %49 = vmatpush.msra.mxu0 %v46
    %50 = vmatpush.msra.mxu0 %v45
    %51 = vmatpush.msra.mxu0 %v44
    %52 = vmatpush.msra.mxu0 %v43
    %53 = vmatpush.msra.mxu0 %v42
    %54 = vmatpush.msra.mxu0 %v41
    %55 = vmatpush.msra.mxu0 %v40
    %56 = vmatpush.msra.mxu0 %v39
    %57 = vmatpush.msra.mxu0 %v38
    %58 = vmatpush.msra.mxu0 %v37
    %59 = vmatpush.msra.mxu0 %v36
    %60 = vmatpush.msra.mxu0 %v35
    %61 = vmatpush.msra.mxu0 %v34
    %62 = vmatpush.msra.mxu0 %v33
    %63 = vmatpush.msra.mxu0 %v32
    %64 = vmatpush.msra.mxu0 %v31
    %65 = vmatmul.f32.gmra.mxu0 %v30
    %v66 = vpop.f32.mrf.mxu0
    %v67 = vadd.f32 %v48, %v66
    %68 = vdwg.mxu0
    %v69 = vmax.f32 %v67, 0.0
    %v70 = vld [vmem:[#allocation2 + $0x80] sm:$0xff]
    %v71 = vld [vmem:[#allocation2 + $0x88] sm:$0xff]
    %v72 = vld [vmem:[#allocation2 + $0x90] sm:$0xff]
    %v73 = vld [vmem:[#allocation2 + $0x98] sm:$0xff]
    %v74 = vld [vmem:[#allocation2 + $0xa0] sm:$0xff]
    %v75 = vld [vmem:[#allocation2 + $0xa8] sm:$0xff]
    %v76 = vld [vmem:[#allocation2 + $0xb0] sm:$0xff]
    %v77 = vld [vmem:[#allocation2 + $0xb8] sm:$0xff]
    %v78 = vld [vmem:[#allocation2 + $0xc0] sm:$0xff]
    %v79 = vld [vmem:[#allocation2 + $0xc8] sm:$0xff]
    %v80 = vld [vmem:[#allocation2 + $0xd0] sm:$0xff]
    %v81 = vld [vmem:[#allocation2 + $0xd8] sm:$0xff]
    %v82 = vld [vmem:[#allocation2 + $0xe0] sm:$0xff]
    %v83 = vld [vmem:[#allocation2 + $0xe8] sm:$0xff]
    %v84 = vld [vmem:[#allocation2 + $0xf0] sm:$0xff]
    %v85 = vld [vmem:[#allocation2 + $0xf8] sm:$0xff]
    %v86 = vld [vmem:[%s2 + $0x1] sm:$0x1]
    %v87 = vperm.slane %v86, 0
    %88 = vmatpush.msra.mxu0 %v85
    %89 = vmatpush.msra.mxu0 %v84
    %90 = vmatpush.msra.mxu0 %v83
    %91 = vmatpush.msra.mxu0 %v82
    %92 = vmatpush.msra.mxu0 %v81
    %93 = vmatpush.msra.mxu0 %v80
    %94 = vmatpush.msra.mxu0 %v79
    %95 = vmatpush.msra.mxu0 %v78
    %96 = vmatpush.msra.mxu0 %v77
    %97 = vmatpush.msra.mxu0 %v76
    %98 = vmatpush.msra.mxu0 %v75
    %99 = vmatpush.msra.mxu0 %v74
    %100 = vmatpush.msra.mxu0 %v73
    %101 = vmatpush.msra.mxu0 %v72
    %102 = vmatpush.msra.mxu0 %v71
    %103 = vmatpush.msra.mxu0 %v70
    %104 = vmatmul.f32.gmra.mxu0 %v69
    %v105 = vpop.f32.mrf.mxu0
    %v106 = vadd.f32 %v87, %v105
    %107 = vdwg.mxu0
    %v108 = vmax.f32 %v106, 0.0
    %v109 = vld [vmem:[#allocation2 + $0x100] sm:$0xff]
    %v110 = vld [vmem:[#allocation2 + $0x108] sm:$0xff]
    %v111 = vld [vmem:[#allocation2 + $0x110] sm:$0xff]
    %v112 = vld [vmem:[#allocation2 + $0x118] sm:$0xff]
    %v113 = vld [vmem:[#allocation2 + $0x120] sm:$0xff]
    %v114 = vld [vmem:[#allocation2 + $0x128] sm:$0xff]
    %v115 = vld [vmem:[#allocation2 + $0x130] sm:$0xff]
    %v116 = vld [vmem:[#allocation2 + $0x138] sm:$0xff]
    %v117 = vld [vmem:[#allocation2 + $0x140] sm:$0xff]
    %v118 = vld [vmem:[#allocation2 + $0x148] sm:$0xff]
    %v119 = vld [vmem:[#allocation2 + $0x150] sm:$0xff]
    %v120 = vld [vmem:[#allocation2 + $0x158] sm:$0xff]
    %v121 = vld [vmem:[#allocation2 + $0x160] sm:$0xff]
    %v122 = vld [vmem:[#allocation2 + $0x168] sm:$0xff]
    %v123 = vld [vmem:[#allocation2 + $0x170] sm:$0xff]
    %v124 = vld [vmem:[#allocation2 + $0x178] sm:$0xff]
    %v125 = vld [vmem:[%s2 + $0x2] sm:$0x1]
    %v126 = vperm.slane %v125, 0
    %127 = vmatpush.msra.mxu0 %v124
    %128 = vmatpush.msra.mxu0 %v123
    %129 = vmatpush.msra.mxu0 %v122
    %130 = vmatpush.msra.mxu0 %v121
    %131 = vmatpush.msra.mxu0 %v120
    %132 = vmatpush.msra.mxu0 %v119
    %133 = vmatpush.msra.mxu0 %v118
    %134 = vmatpush.msra.mxu0 %v117
    %135 = vmatpush.msra.mxu0 %v116
    %136 = vmatpush.msra.mxu0 %v115
    %137 = vmatpush.msra.mxu0 %v114
    %138 = vmatpush.msra.mxu0 %v113
    %139 = vmatpush.msra.mxu0 %v112
    %140 = vmatpush.msra.mxu0 %v111
    %141 = vmatpush.msra.mxu0 %v110
    %142 = vmatpush.msra.mxu0 %v109
    %143 = vmatmul.f32.gmra.mxu0 %v108
    %v144 = vpop.f32.mrf.mxu0
    %v145 = vadd.f32 %v126, %v144
    %146 = vdwg.mxu0
    %v147 = vmax.f32 %v145, 0.0
    %v148 = vld [vmem:[#allocation2 + $0x180] sm:$0xff]
    %v149 = vld [vmem:[#allocation2 + $0x188] sm:$0xff]
    %v150 = vld [vmem:[#allocation2 + $0x190] sm:$0xff]
    %v151 = vld [vmem:[#allocation2 + $0x198] sm:$0xff]
    %v152 = vld [vmem:[#allocation2 + $0x1a0] sm:$0xff]
    %v153 = vld [vmem:[#allocation2 + $0x1a8] sm:$0xff]
    %v154 = vld [vmem:[#allocation2 + $0x1b0] sm:$0xff]
    %v155 = vld [vmem:[#allocation2 + $0x1b8] sm:$0xff]
    %v156 = vld [vmem:[#allocation2 + $0x1c0] sm:$0xff]
    %v157 = vld [vmem:[#allocation2 + $0x1c8] sm:$0xff]
    %v158 = vld [vmem:[#allocation2 + $0x1d0] sm:$0xff]
    %v159 = vld [vmem:[#allocation2 + $0x1d8] sm:$0xff]
    %v160 = vld [vmem:[#allocation2 + $0x1e0] sm:$0xff]
    %v161 = vld [vmem:[#allocation2 + $0x1e8] sm:$0xff]
    %v162 = vld [vmem:[#allocation2 + $0x1f0] sm:$0xff]
    %v163 = vld [vmem:[#allocation2 + $0x1f8] sm:$0xff]
    %v164 = vld [vmem:[%s2 + $0x3] sm:$0x1]
    %v165 = vperm.slane %v164, 0
    %166 = vmatpush.msra.mxu0 %v163
    %167 = vmatpush.msra.mxu0 %v162
    %168 = vmatpush.msra.mxu0 %v161
    %169 = vmatpush.msra.mxu0 %v160
    %170 = vmatpush.msra.mxu0 %v159
    %171 = vmatpush.msra.mxu0 %v158
    %172 = vmatpush.msra.mxu0 %v157
    %173 = vmatpush.msra.mxu0 %v156
    %174 = vmatpush.msra.mxu0 %v155
    %175 = vmatpush.msra.mxu0 %v154
    %176 = vmatpush.msra.mxu0 %v153
    %177 = vmatpush.msra.mxu0 %v152
    %178 = vmatpush.msra.mxu0 %v151
    %179 = vmatpush.msra.mxu0 %v150
    %180 = vmatpush.msra.mxu0 %v149
    %181 = vmatpush.msra.mxu0 %v148
    %182 = vmatmul.f32.gmra.mxu0 %v147
    %v183 = vpop.f32.mrf.mxu0
    %v184 = vadd.f32 %v165, %v183
    %185 = vdwg.mxu0
    %v186 = vlaneseq
    %v187 = vand.u32 %v186, 127
    %vm188 = vcmp.lt.s32.totalorder %v187, 6
    %v189 = vsel %vm188, %v184, 0.0
    %190 = vadd.xlane.f32.xlu0 %v189
    %v191 = vpop.xlane.xlu0 %190
    %v192 = vmul.f32 %v191, 0.16666667
    %vm193 = vcmp.eq.s32.totalorder %v187, 6
    %v194 = vsel %vm193, %v184, 0.0
    %195 = vadd.xlane.f32.xlu0 %v194
    %v196 = vpop.xlane.xlu0 %195
    %v197 = vadd.f32 %v196, %v184
    %v198 = vsub.f32 %v197, %v192
    %v199 = vsel %vm188, %v198, 0.0
    %200 = vst [vmem:[%s3] sm:$0xff] %v199
    // Predicated region
    $region18: #{dueling_dqn_forward.1} parent=1 // pred_check
      _
    $region19: #{dueling_dqn_forward.1} parent=1 // pred_check_branch
      %202 = sbr.rel (0) target = $region21
    $region20: #{dueling_dqn_forward.1} parent=1 // pred_region
      _
    $region21: #{dueling_dqn_forward.1} parent=1 // pred_fallthru
      _
    // Predicated region
    $region22: #{dueling_dqn_forward.1} parent=1 // pred_check
      _
    $region23: #{dueling_dqn_forward.1} parent=1 // pred_check_branch
      %204 = sbr.rel (0) target = $region25
    $region24: #{dueling_dqn_forward.1} parent=1 // pred_region
      _
    $region25: #{dueling_dqn_forward.1} parent=1 // pred_fallthru
      _
    %205 = vsyncpa [#allocation3], 1

</llo_original>
